<compile_context>
chip_gen: v5e
topology: v5e:2x2
jax: 0.10.0
libtpu: 0.0.40
codegen_flags: <defaults>
</compile_context>

<pallas_src>
import math

import jax
import jax.numpy as jnp
from jax.experimental import pallas as pl
from jax.experimental.pallas import tpu as pltpu


def _eca_kernel(taps_ref, x_ref, o_ref):
    # taps_ref: (k,) SMEM conv-1d taps (float32)
    # x_ref, o_ref: (Bt, C, HW) VMEM blocks (input dtype)
    Bt, C, HW = x_ref.shape
    k = taps_ref.shape[0]
    pad = (k - 1) // 2

    # 1) AdaptiveAvgPool2d(1): mean over the spatial (lane) axis, f32 accum.
    #    No full-tile f32 copy is kept live; only the (Bt, C) result is f32.
    y = jnp.sum(x_ref[...], axis=-1, dtype=jnp.float32) * (1.0 / HW)   # (Bt, C)

    # 2) Conv1d(1, 1, k, padding=(k-1)//2, bias=False) over the channel axis
    #    as k shifted FMAs.  Shifts go to the XLU (pltpu.roll); wrapped lanes
    #    are masked to reproduce zero-padding; taps are SMEM scalars.
    col = jax.lax.broadcasted_iota(jnp.int32, (Bt, C), 1)
    yc = jnp.zeros_like(y)
    for j in range(k):                      # k is tiny (3..7) and static
        d = j - pad                         # yc[c] += w[j] * y[c + d]
        if d == 0:
            shifted = y
        else:
            shifted = pltpu.roll(y, shift=(-d) % C, axis=1)
            valid = (col + d >= 0) & (col + d < C)
            shifted = jnp.where(valid, shifted, 0.0)
        yc = yc + taps_ref[j] * shifted

    # 3) Sigmoid gate, broadcast multiply in the input dtype.
    gate = jax.nn.sigmoid(yc).astype(o_ref.dtype)                      # (Bt, C)
    o_ref[...] = x_ref[...] * gate[:, :, None]


def eca_forward(x, conv_w, *, block_bytes=3 << 20):
    """x: (B, C, H, W); conv_w: (k,) conv1d weights (PyTorch weight[0, 0, :])."""
    B, C, H, W = x.shape
    HW = H * W
    itemsize = jnp.dtype(x.dtype).itemsize
    per_elem = C * HW * itemsize

    # Pack as many batch elements per block as fit the budget (largest divisor
    # of B).  Bigger lane-dense blocks amortize the ~0.35us per-grid-step cost
    # of this purely bandwidth-bound kernel; 4x (double-buffered in+out) stays
    # under the v5e 16 MiB default scoped VMEM when per_elem is small.
    Bt = 1
    for cand in range(1, B + 1):
        if B % cand == 0 and cand * per_elem <= block_bytes:
            Bt = cand

    # TODO(synk): for feature maps where even a single (1, C, HW) slab blows the
    # VMEM budget (notably v7x: 64 MiB physical / 32 MiB scoped), switch to a
    # two-pass design (pooling pass + freely HW-tiled gated-multiply pass).
    vmem_needed = 4 * Bt * per_elem + (1 << 20)
    cparams = pltpu.CompilerParams(
        dimension_semantics=("parallel",),
        vmem_limit_bytes=vmem_needed if vmem_needed > (16 << 20) else None,
    )

    x3 = x.reshape(B, C, HW)
    taps = conv_w.astype(jnp.float32)

    out3 = pl.pallas_call(
        _eca_kernel,
        out_shape=jax.ShapeDtypeStruct((B, C, HW), x.dtype),
        grid_spec=pltpu.PrefetchScalarGridSpec(
            num_scalar_prefetch=0,
            grid=(B // Bt,),
            in_specs=[
                pl.BlockSpec(memory_space=pltpu.MemorySpace.SMEM),  # conv taps
                pl.BlockSpec((Bt, C, HW), lambda b: (b, 0, 0)),     # x
            ],
            out_specs=pl.BlockSpec((Bt, C, HW), lambda b: (b, 0, 0)),
        ),
        compiler_params=cparams,
    )(taps, x3)

    return out3.reshape(B, C, H, W)


def _eca_reference(x, conv_w):
    """Pure-JAX reference matching the PyTorch forward."""
    B, C, H, W = x.shape
    k = conv_w.shape[0]
    pad = (k - 1) // 2
    y = jnp.mean(x.astype(jnp.float32), axis=(2, 3))          # (B, C)
    ypad = jnp.pad(y, ((0, 0), (pad, pad)))
    yc = jnp.zeros_like(y)
    for j in range(k):
        yc = yc + conv_w[j] * ypad[:, j:j + C]
    gate = jax.nn.sigmoid(yc)[:, :, None, None].astype(x.dtype)
    return x * gate


if __name__ == "__main__":
    B, C, H, W = 2, 8, 16, 16

    # k_size from the module's __init__ (gamma=2, b=1): C=8 -> t=2 -> k_size=3.
    gamma, b = 2, 1
    t = int(abs((math.log(C, 2) + b) / gamma))
    k_size = t if t % 2 else t + 1

    key = jax.random.PRNGKey(0)
    kx, kw = jax.random.split(key)
    x = jax.random.normal(kx, (B, C, H, W), dtype=jnp.float32)
    # Deterministic synthetic conv1d weight (matches nn.Conv1d(1,1,k).weight[0,0]).
    conv_w = jax.random.uniform(kw, (k_size,), dtype=jnp.float32,
                                minval=-1.0, maxval=1.0)

    out = eca_forward(x, conv_w)
    out = jax.block_until_ready(out)

    ref = _eca_reference(x, conv_w)
    assert out.shape == x.shape and out.dtype == x.dtype
    assert jnp.allclose(out, ref, atol=1e-5, rtol=1e-5), "mismatch vs reference"

    print("KERNEL_OK")
</pallas_src>

<mosaic_0001>
module attributes {stable_mosaic.version = 11 : i64} {
  func.func @_eca_kernel(%arg0: i32, %arg1: memref<3xf32, #tpu.memory_space<smem>>, %arg2: memref<2x8x256xf32, #tpu.memory_space<vmem>>, %arg3: memref<2x8x256xf32, #tpu.memory_space<vmem>>) attributes {dimension_semantics = [#tpu.dimension_semantics<parallel>], iteration_bounds = array<i64: 1>, scalar_prefetch = 0 : i64, scratch_operands = 0 : i64, tpu.core_type = #tpu.core_type<tc>, window_params = [{transform_indices = @transform_0, window_bounds = array<i64: 3>}, {transform_indices = @transform_1, window_bounds = array<i64: 2, 8, 256>}, {transform_indices = @transform_2, window_bounds = array<i64: 2, 8, 256>}]} {
    %c0 = arith.constant 0 : index
    %c0_0 = arith.constant 0 : index
    %c0_1 = arith.constant 0 : index
    %0 = vector.load %arg2[%c0, %c0_0, %c0_1] : memref<2x8x256xf32, #tpu.memory_space<vmem>>, vector<2x8x256xf32>
    %cst = arith.constant dense<0.000000e+00> : vector<2x8xf32>
    %1 = vector.multi_reduction <add>, %0, %cst [2] : vector<2x8x256xf32> to vector<2x8xf32>
    %cst_2 = arith.constant 3.906250e-03 : f32
    %2 = vector.broadcast %cst_2 : f32 to vector<2x8xf32>
    %3 = arith.mulf %1, %2 : vector<2x8xf32>
    %4 = tpu.iota {dimensions = array<i32: 1>} : vector<2x8xi32>
    %cst_3 = arith.constant 0.000000e+00 : f32
    %5 = vector.broadcast %cst_3 : f32 to vector<2x8xf32>
    %c1_i32 = arith.constant 1 : i32
    %6 = tpu.dynamic_rotate %3 by %c1_i32 dim 1 : vector<2x8xf32>, i32 -> vector<2x8xf32>
    %c-1_i32 = arith.constant -1 : i32
    %7 = vector.broadcast %c-1_i32 : i32 to vector<2x8xi32>
    %8 = arith.addi %4, %7 : vector<2x8xi32>
    %c0_i32 = arith.constant 0 : i32
    %9 = vector.broadcast %c0_i32 : i32 to vector<2x8xi32>
    %10 = arith.cmpi sge, %8, %9 : vector<2x8xi32>
    %c-1_i32_4 = arith.constant -1 : i32
    %11 = vector.broadcast %c-1_i32_4 : i32 to vector<2x8xi32>
    %12 = arith.addi %4, %11 : vector<2x8xi32>
    %c8_i32 = arith.constant 8 : i32
    %13 = vector.broadcast %c8_i32 : i32 to vector<2x8xi32>
    %14 = arith.cmpi slt, %12, %13 : vector<2x8xi32>
    %15 = arith.andi %10, %14 : vector<2x8xi1>
    %cst_5 = arith.constant 0.000000e+00 : f32
    %16 = vector.broadcast %cst_5 : f32 to vector<2x8xf32>
    %17 = arith.select %15, %6, %16 : vector<2x8xi1>, vector<2x8xf32>
    %c0_6 = arith.constant 0 : index
    %18 = memref.load %arg1[%c0_6] : memref<3xf32, #tpu.memory_space<smem>>
    %19 = vector.broadcast %18 : f32 to vector<2x8xf32>
    %20 = arith.mulf %19, %17 : vector<2x8xf32>
    %21 = arith.addf %5, %20 : vector<2x8xf32>
    %c1 = arith.constant 1 : index
    %22 = memref.load %arg1[%c1] : memref<3xf32, #tpu.memory_space<smem>>
    %23 = vector.broadcast %22 : f32 to vector<2x8xf32>
    %24 = arith.mulf %23, %3 : vector<2x8xf32>
    %25 = arith.addf %21, %24 : vector<2x8xf32>
    %c7_i32 = arith.constant 7 : i32
    %26 = tpu.dynamic_rotate %3 by %c7_i32 dim 1 : vector<2x8xf32>, i32 -> vector<2x8xf32>
    %c1_i32_7 = arith.constant 1 : i32
    %27 = vector.broadcast %c1_i32_7 : i32 to vector<2x8xi32>
    %28 = arith.addi %4, %27 : vector<2x8xi32>
    %c0_i32_8 = arith.constant 0 : i32
    %29 = vector.broadcast %c0_i32_8 : i32 to vector<2x8xi32>
    %30 = arith.cmpi sge, %28, %29 : vector<2x8xi32>
    %c1_i32_9 = arith.constant 1 : i32
    %31 = vector.broadcast %c1_i32_9 : i32 to vector<2x8xi32>
    %32 = arith.addi %4, %31 : vector<2x8xi32>
    %c8_i32_10 = arith.constant 8 : i32
    %33 = vector.broadcast %c8_i32_10 : i32 to vector<2x8xi32>
    %34 = arith.cmpi slt, %32, %33 : vector<2x8xi32>
    %35 = arith.andi %30, %34 : vector<2x8xi1>
    %cst_11 = arith.constant 0.000000e+00 : f32
    %36 = vector.broadcast %cst_11 : f32 to vector<2x8xf32>
    %37 = arith.select %35, %26, %36 : vector<2x8xi1>, vector<2x8xf32>
    %c2 = arith.constant 2 : index
    %38 = memref.load %arg1[%c2] : memref<3xf32, #tpu.memory_space<smem>>
    %39 = vector.broadcast %38 : f32 to vector<2x8xf32>
    %40 = arith.mulf %39, %37 : vector<2x8xf32>
    %41 = arith.addf %25, %40 : vector<2x8xf32>
    %42 = arith.negf %41 : vector<2x8xf32>
    %43 = math.exp %42 : vector<2x8xf32>
    %cst_12 = arith.constant 1.000000e+00 : f32
    %44 = vector.broadcast %cst_12 : f32 to vector<2x8xf32>
    %45 = arith.addf %44, %43 : vector<2x8xf32>
    %46 = arith.divf %44, %45 : vector<2x8xf32>
    %c0_13 = arith.constant 0 : index
    %c0_14 = arith.constant 0 : index
    %c0_15 = arith.constant 0 : index
    %47 = vector.load %arg2[%c0_13, %c0_14, %c0_15] : memref<2x8x256xf32, #tpu.memory_space<vmem>>, vector<2x8x256xf32>
    %48 = vector.shape_cast %46 : vector<2x8xf32> to vector<2x8x1xf32>
    %49 = vector.broadcast %48 : vector<2x8x1xf32> to vector<2x8x256xf32>
    %50 = arith.mulf %47, %49 : vector<2x8x256xf32>
    %c0_16 = arith.constant 0 : index
    %c0_17 = arith.constant 0 : index
    %c0_18 = arith.constant 0 : index
    %51 = vector.load %arg3[%c0_16, %c0_17, %c0_18] : memref<2x8x256xf32, #tpu.memory_space<vmem>>, vector<2x8x256xf32>
    tpu.vector_store %arg3[%c0_16, %c0_17, %c0_18], %50 {strides = array<i32>} : memref<2x8x256xf32, #tpu.memory_space<vmem>>, vector<2x8x256xf32>,
    return
  }
  func.func @transform_0(%arg0: i32) -> i32 {
    %c0_i32 = arith.constant 0 : i32
    %c0_i32_0 = arith.constant 0 : i32
    return %c0_i32 : i32
  }
  func.func @transform_1(%arg0: i32) -> (i32, i32, i32) {
    %c0_i32 = arith.constant 0 : i32
    %c0_i32_0 = arith.constant 0 : i32
    %c0_i32_1 = arith.constant 0 : i32
    return %arg0, %c0_i32, %c0_i32_0 : i32, i32, i32
  }
  func.func @transform_2(%arg0: i32) -> (i32, i32, i32) {
    %c0_i32 = arith.constant 0 : i32
    %c0_i32_0 = arith.constant 0 : i32
    %c0_i32_1 = arith.constant 0 : i32
    return %arg0, %c0_i32, %c0_i32_0 : i32, i32, i32
  }
}

</mosaic_0001>

<llo_original>
// kernel: tpu_custom_call.1
$region0: #{tpu_custom_call.1}
  #allocation0 [shape = 'u32[]', space=smem, size = 0x4, offset = 0x4, fixed_abs, tag = 'smem constant byte address 0x4 - core index']
  #allocation1 [shape = 'u32[72,128]{1,0:T(1,128)}', space=vmem, size = 0x9000, scoped, tag = 'internal scratch']
  %s0 = inlined_call_operand.hbm [shape: f32[3], index: 0, kind: input, shape index: {}]
  %s1 = inlined_call_operand.hbm [shape: f32[2,8,256], index: 1, kind: input, shape index: {}]
  %s2 = inlined_call_operand.hbm [shape: f32[2,8,256], index: 2, kind: output, shape index: {}]
  %s3 = sld [smem:[#allocation0]]
  $region26: #{tpu_custom_call.1} parent=0
    _
  %s5 = ssub.s32 1, %s3
  %s6 = scalar_select 0, %s5, %s3
  $region1: #{tpu_custom_call.1} parent=0
    #allocation2 [shape = 'u8[512]{0}', space=smem, size = 0x200, scoped, tag = 'input window, operand 0, single buffered']
    #allocation3 [shape = 's32[1]{0}', space=sflag, size = 0x4, scoped, tag = 'scoped memory for tpu_custom_call.1']
    #allocation4 [shape = 's32[1]{0}', space=sflag, size = 0x4, scoped, tag = 'scoped memory for tpu_custom_call.1']
    #allocation5 [shape = 's32[1]{0}', space=sflag, size = 0x4, scoped, tag = 'scoped memory for tpu_custom_call.1']
    #allocation6 [shape = 'u8[16384]{0}', space=vmem, size = 0x4000, scoped, tag = 'input window, operand 1, single buffered']
    #allocation7 [shape = 'u8[16384]{0}', space=vmem, size = 0x4000, scoped, tag = 'output window, operand 0, single buffered']
    %7 = vsyncpa [#allocation5], 0
    %8 = vsyncpa [#allocation3], 0
    %9 = vsyncpa [#allocation4], 0
    // Predicated region
    $region2: #{tpu_custom_call.1} parent=1 // pred_check
      _
    $region3: #{tpu_custom_call.1} parent=1 // pred_check_branch
      %11 = sbr.rel (0) target = $region5
    $region4: #{tpu_custom_call.1} parent=1 // pred_region
      %13 = vsyncadd [#allocation5], 0
      %s15 = sshll.u32 %s0, 4
      %s16 = int_to_ptr.hbm [resolvable:$true] %s15
      %18 = dma.hbm_to_smem %s16, 16, [#allocation2], [#allocation5]
    $region5: #{tpu_custom_call.1} parent=1 // pred_fallthru
      _
    // Predicated region
    $region6: #{tpu_custom_call.1} parent=1 // pred_check
      _
    $region7: #{tpu_custom_call.1} parent=1 // pred_check_branch
      %20 = sbr.rel (0) target = $region9
    $region8: #{tpu_custom_call.1} parent=1 // pred_region
      %22 = vsyncadd [#allocation3], 0
      %s23 = sshll.u32 %s1, 4
      %s24 = int_to_ptr.hbm [resolvable:$true] %s23
      %s25 = sshll.u32 [#allocation6], 4
      %s26 = int_to_ptr.vmem [resolvable:$true] %s25
      %31 = dma.hbm_to_vmem [thread:$0]  %s24, 512, %s26, [#allocation3], 256, 256, 16
    $region9: #{tpu_custom_call.1} parent=1 // pred_fallthru
      _
    // Predicated region
    $region10: #{tpu_custom_call.1} parent=1 // pred_check
      _
    $region11: #{tpu_custom_call.1} parent=1 // pred_check_branch
      %33 = sbr.rel (0) target = $region13
    $region12: #{tpu_custom_call.1} parent=1 // pred_region
      %35 = dma.done [#allocation5], 16
    $region13: #{tpu_custom_call.1} parent=1 // pred_fallthru
      _
    // Predicated region
    $region14: #{tpu_custom_call.1} parent=1 // pred_check
      _
    $region15: #{tpu_custom_call.1} parent=1 // pred_check_branch
      %37 = sbr.rel (0) target = $region17
    $region16: #{tpu_custom_call.1} parent=1 // pred_region
      %39 = dma.done [#allocation3], 512
    $region17: #{tpu_custom_call.1} parent=1 // pred_fallthru
      _
    %40 = sfence
    %v41 = vld [vmem:[#allocation6] sm:$0xff]
    %v42 = vld [vmem:[#allocation6 + $0x8] sm:$0xff]
    %v43 = vld [vmem:[#allocation6 + $0x10] sm:$0xff]
    %v44 = vld [vmem:[#allocation6 + $0x18] sm:$0xff]
    %v45 = vadd.f32 %v41, %v42
    %46 = vadd.xlane.f32.xlu0 %v45
    %v47 = vpop.xlane.xlu0 %46
    %v48 = vadd.f32 %v43, %v44
    %49 = vadd.xlane.f32.xlu0 %v48
    %v50 = vpop.xlane.xlu0 %49
    %v51 = vmul.f32 %v47, 0.00390625
    %v52 = vmul.f32 %v50, 0.00390625
    %v53 = vlaneseq
    %v54 = vand.u32 %v53, 127
    %v57 = vperm.slane %v51, %v54
    %v58 = vperm.slane %v52, %v54
    %vm59 = vcmask 1041409
    %v60 = vsel %vm59, %v58, %v57
    %vm62 = vcmask 1047616
    %63 = vrot.lane.b32.xlu0 %v60, 8
    %v64 = vpop.permute.xlu0 %63
    %v65 = vsel %vm62, %v64, %v60
    %66 = vrot.lane.b32.xlu0 %v65, 8
    %v67 = vpop.permute.xlu0 %66
    %v68 = vsel %vm62, %v67, %v60
    %v69 = vadd.s32 %v54, 4294967295
    %vm70 = vcmp.ge.s32.totalorder %v69, 0
    %vm71 = vcmp.lt.s32.totalorder %v69, 8
    %vm72 = vmand %vm70, %vm71
    %74 = vrot.lane.b32.xlu0 %v68, 121
    %v75 = vpop.permute.xlu0 %74
    %v77 = vsel %vm72, %v75, 0.0
    %s78 = sld [smem:[#allocation2]]
    %v79 = vstv %s78
    %v80 = vmul.f32 %v79, %v77
    %v81 = vadd.f32 %v80, 0.0
    %s82 = sld [smem:[#allocation2 + $0x1]]
    %v83 = vstv %s82
    %v84 = vmul.f32 %v83, %v51
    %v85 = vmul.f32 %v83, %v52
    %v88 = vperm.slane %v84, %v54
    %v89 = vperm.slane %v85, %v54
    %v90 = vsel %vm59, %v89, %v88
    %v92 = vadd.f32 %v81, %v90
    %v93 = vadd.s32 %v54, 1
    %vm94 = vcmp.ge.s32.totalorder %v93, 0
    %vm95 = vcmp.lt.s32.totalorder %v93, 8
    %vm96 = vmand %vm94, %vm95
    %97 = vrot.lane.b32.xlu0 %v68, 127
    %v98 = vpop.permute.xlu0 %97
    %v100 = vsel %vm96, %v98, 0.0
    %s101 = sld [smem:[#allocation2 + $0x2]]
    %v102 = vstv %s101
    %v103 = vmul.f32 %v102, %v100
    %v104 = vadd.f32 %v92, %v103
    %v105 = vxor.u32 %v104, 2147483648
    %v106 = vmul.f32 %v105, 1.442695
    %v107 = vpow.pop %v106
    %v108 = vadd.f32 %v107, 1.0
    %v109 = vrcp.pop %v108
    %v110 = vmul.f32 %v108, %v109
    %v111 = vsub.f32 1.0, %v110
    %v112 = vmul.f32 %v109, %v111
    %v113 = vadd.f32 %v109, %v112
    %vm114 = vweird.f32 %v108
    %vm115 = vweird.f32 %v109
    %vm116 = vmor %vm114, %vm115
    %v117 = vsel %vm116, %v109, %v113
    %v118 = vand.u32 2147483647, %v108
    %vm119 = vcmp.eq.f32.partialorder %v118, 8.507059e+37
    %v120 = vand.u32 %v108, 2147483648
    %v121 = vor.u32 1.1754944e-38, %v120
    %v122 = vsel %vm119, %v121, %v117
    %v123 = vmul.f32 1.0, %v122
    %v124 = vperm.slane %v123, 0
    %v125 = vlaneseq
    %v126 = vshrl.u32 %v125, 7
    %128 = vset.pattern.permute.xlu0 %v126
    %129 = vperm.xlu0 %128, %v124
    %v130 = vpop.permute.xlu0 %129
    %v131 = vperm.slane %v123, 1
    %v132 = vlaneseq
    %v133 = vshrl.u32 %v132, 7
    %135 = vset.pattern.permute.xlu0 %v133
    %136 = vperm.xlu0 %135, %v131
    %v137 = vpop.permute.xlu0 %136
    %v138 = vmul.f32 %v41, %v130
    %v139 = vmul.f32 %v42, %v130
    %v140 = vmul.f32 %v43, %v137
    %v141 = vmul.f32 %v44, %v137
    %142 = vst [vmem:[#allocation7] sm:$0xff] %v138
    %143 = vst [vmem:[#allocation7 + $0x8] sm:$0xff] %v139
    %144 = vst [vmem:[#allocation7 + $0x10] sm:$0xff] %v140
    %145 = vst [vmem:[#allocation7 + $0x18] sm:$0xff] %v141
    // Predicated region
    $region18: #{tpu_custom_call.1} parent=1 // pred_check
      _
    $region19: #{tpu_custom_call.1} parent=1 // pred_check_branch
      %147 = sbr.rel (0) target = $region21
    $region20: #{tpu_custom_call.1} parent=1 // pred_region
      %149 = vsyncadd [#allocation4], 0
      %s150 = sshll.u32 [#allocation7], 4
      %s151 = int_to_ptr.vmem [resolvable:$true] %s150
      %s152 = sshll.u32 %s2, 4
      %s153 = int_to_ptr.hbm [resolvable:$true] %s152
      %158 = dma.vmem_to_hbm [thread:$0]  %s151, 512, %s153, [#allocation4], 256, 256, 16
    $region21: #{tpu_custom_call.1} parent=1 // pred_fallthru
      _
    // Predicated region
    $region22: #{tpu_custom_call.1} parent=1 // pred_check
      _
    $region23: #{tpu_custom_call.1} parent=1 // pred_check_branch
      %160 = sbr.rel (0) target = $region25
    $region24: #{tpu_custom_call.1} parent=1 // pred_region
      %162 = dma.done [#allocation4], 512
    $region25: #{tpu_custom_call.1} parent=1 // pred_fallthru
      _
    %163 = vsyncpa [#allocation3], 1
    %164 = vsyncpa [#allocation4], 1
    %165 = vsyncpa [#allocation5], 1

</llo_original>
